<compile_context>
chip_gen: v7x
topology: tpu7x:2x2x1
jax: 0.10.0
libtpu: 0.0.40
codegen_flags: <defaults>
</compile_context>

<pallas_src>
import jax
import jax.numpy as jnp
from jax.experimental import pallas as pl
from jax.experimental.pallas import tpu as pltpu

LANE = 128
MAX_TILE_R = 2048   # (2048, 128) f32 tile = 1 MiB/input/buffer -> 4 MiB pipelined.
N_PAR = 2           # leading parallel axis (v7x megacore split; harmless on 1-TC chips)
SMOOTH = 1.0


def _soft_dice_kernel(p_ref, t_ref, inter_ref, total_ref):
    # Zero the resident output accumulators on the first step of the reduction axis.
    @pl.when(pl.program_id(1) == 0)
    def _():
        inter_ref[...] = jnp.zeros_like(inter_ref)
        total_ref[...] = jnp.zeros_like(total_ref)

    p = p_ref[...].astype(jnp.float32)
    t = t_ref[...].astype(jnp.float32)

    tile_r = p.shape[0]
    # vreg-shaped partial sums: the (tile_r,128)->(tile_r//8,8,128) reshape keeps
    # the native (8,128) tile layout, and the axis-0 sum is plain VPU vreg adds.
    inter_ref[...] += jnp.sum((p * t).reshape(tile_r // 8, 8, LANE), axis=0)
    total_ref[...] += jnp.sum((p + t).reshape(tile_r // 8, 8, LANE), axis=0)


def _row_align(dtype):
    # Sublane packing: 8 rows for 4-byte, 16 for 2-byte, 32 for 1-byte dtypes.
    itemsize = jnp.dtype(dtype).itemsize
    return max(8, 32 // max(itemsize, 1))


def _round_up(x, m):
    return ((x + m - 1) // m) * m


def soft_dice_loss(predictions, targets):
    """1 - dice_score(predictions, targets); returns a float32 scalar."""
    # Keep native dtypes (halves HBM traffic for bf16). Bool masks cast up front.
    if predictions.dtype == jnp.bool_:
        predictions = predictions.astype(jnp.float32)
    if targets.dtype == jnp.bool_:
        targets = targets.astype(jnp.float32)

    p = predictions.reshape(-1)
    t = targets.reshape(-1)
    n = p.shape[0]
    if n == 0:  # empty input: dice = smooth/smooth = 1 -> loss = 0
        return jnp.float32(0.0)

    align = max(_row_align(p.dtype), _row_align(t.dtype))
    rows_needed = pl.cdiv(n, LANE)

    # Split rows across the parallel axis, then pick the largest tile (<= MAX_TILE_R)
    # that minimizes padding.
    n_par = N_PAR if rows_needed >= N_PAR * align else 1
    rows_per_par = pl.cdiv(rows_needed, n_par)
    tiles_per_par = pl.cdiv(rows_per_par, MAX_TILE_R)
    tile_r = _round_up(pl.cdiv(rows_per_par, tiles_per_par), align)
    rows_padded = n_par * tiles_per_par * tile_r

    pad = rows_padded * LANE - n
    if pad:  # zero padding is benign for intersection and the p+t sum
        p = jnp.pad(p, (0, pad))
        t = jnp.pad(t, (0, pad))
    p = p.reshape(rows_padded, LANE)
    t = t.reshape(rows_padded, LANE)

    in_map = lambda c, i: (c * tiles_per_par + i, 0)
    out_map = lambda c, i: (c, 0)  # output block resident across the reduction axis

    inter_part, total_part = pl.pallas_call(
        _soft_dice_kernel,
        out_shape=(
            jax.ShapeDtypeStruct((n_par * 8, LANE), jnp.float32),
            jax.ShapeDtypeStruct((n_par * 8, LANE), jnp.float32),
        ),
        grid_spec=pltpu.PrefetchScalarGridSpec(
            num_scalar_prefetch=0,
            grid=(n_par, tiles_per_par),
            in_specs=[
                pl.BlockSpec((tile_r, LANE), in_map),
                pl.BlockSpec((tile_r, LANE), in_map),
            ],
            out_specs=(
                pl.BlockSpec((8, LANE), out_map),
                pl.BlockSpec((8, LANE), out_map),
            ),
        ),
        compiler_params=pltpu.CompilerParams(
            dimension_semantics=("parallel", "arbitrary"),
        ),
    )(p, t)

    # Tiny final reduce (at most 2x8x128 per output) + smooth math in the wrapper.
    intersection = jnp.sum(inter_part)
    total = jnp.sum(total_part)  # == sum(predictions) + sum(targets)
    return 1.0 - (2.0 * intersection + SMOOTH) / (total + SMOOTH)


def _reference(predictions, targets):
    smooth = 1.0
    iflat = predictions.reshape(-1).astype(jnp.float32)
    tflat = targets.reshape(-1).astype(jnp.float32)
    intersection = jnp.sum(iflat * tflat)
    return 1.0 - (2.0 * intersection + smooth) / (jnp.sum(iflat) + jnp.sum(tflat) + smooth)


if __name__ == "__main__":
    key = jax.random.PRNGKey(0)
    kp, kt = jax.random.split(key)
    # Typical segmentation shapes: NCHW probabilities vs. binary masks.
    predictions = jax.nn.sigmoid(jax.random.normal(kp, (2, 4, 16, 16), dtype=jnp.float32))
    targets = (jax.random.uniform(kt, (2, 4, 16, 16)) > 0.5).astype(jnp.float32)

    loss = jax.block_until_ready(soft_dice_loss(predictions, targets))
    ref = jax.block_until_ready(_reference(predictions, targets))

    assert jnp.allclose(loss, ref, rtol=1e-5, atol=1e-5), (loss, ref)
    print("KERNEL_OK")
</pallas_src>

<mosaic_0001>
module attributes {stable_mosaic.version = 11 : i64} {
  func.func @_soft_dice_kernel(%arg0: i32, %arg1: i32, %arg2: memref<8x128xf32, #tpu.memory_space<vmem>>, %arg3: memref<8x128xf32, #tpu.memory_space<vmem>>, %arg4: memref<8x128xf32, #tpu.memory_space<vmem>>, %arg5: memref<8x128xf32, #tpu.memory_space<vmem>>) attributes {dimension_semantics = [#tpu.dimension_semantics<parallel>, #tpu.dimension_semantics<arbitrary>], iteration_bounds = array<i64: 2, 1>, scalar_prefetch = 0 : i64, scratch_operands = 0 : i64, tpu.core_type = #tpu.core_type<tc>, window_params = [{transform_indices = @transform_0, window_bounds = array<i64: 8, 128>}, {transform_indices = @transform_1, window_bounds = array<i64: 8, 128>}, {transform_indices = @transform_2, window_bounds = array<i64: 8, 128>}, {transform_indices = @transform_3, window_bounds = array<i64: 8, 128>}]} {
    %c0_i32 = arith.constant 0 : i32
    %0 = arith.cmpi eq, %arg1, %c0_i32 : i32
    %1 = arith.extui %0 : i1 to i32
    %c0_i32_0 = arith.constant 0 : i32
    %2 = arith.cmpi ne, %1, %c0_i32_0 : i32
    scf.if %2 {
      %cst_13 = arith.constant 0.000000e+00 : f32
      %17 = vector.broadcast %cst_13 : f32 to vector<8x128xf32>
      %c0_14 = arith.constant 0 : index
      %c0_15 = arith.constant 0 : index
      %18 = vector.load %arg4[%c0_14, %c0_15] : memref<8x128xf32, #tpu.memory_space<vmem>>, vector<8x128xf32>
      tpu.vector_store %arg4[%c0_14, %c0_15], %17 {strides = array<i32>} : memref<8x128xf32, #tpu.memory_space<vmem>>, vector<8x128xf32>,
      %cst_16 = arith.constant 0.000000e+00 : f32
      %19 = vector.broadcast %cst_16 : f32 to vector<8x128xf32>
      %c0_17 = arith.constant 0 : index
      %c0_18 = arith.constant 0 : index
      %20 = vector.load %arg5[%c0_17, %c0_18] : memref<8x128xf32, #tpu.memory_space<vmem>>, vector<8x128xf32>
      tpu.vector_store %arg5[%c0_17, %c0_18], %19 {strides = array<i32>} : memref<8x128xf32, #tpu.memory_space<vmem>>, vector<8x128xf32>,
    } else {
    }
    %c0 = arith.constant 0 : index
    %c0_1 = arith.constant 0 : index
    %3 = vector.load %arg2[%c0, %c0_1] : memref<8x128xf32, #tpu.memory_space<vmem>>, vector<8x128xf32>
    %c0_2 = arith.constant 0 : index
    %c0_3 = arith.constant 0 : index
    %4 = vector.load %arg3[%c0_2, %c0_3] : memref<8x128xf32, #tpu.memory_space<vmem>>, vector<8x128xf32>
    %c0_4 = arith.constant 0 : index
    %c0_5 = arith.constant 0 : index
    %5 = vector.load %arg4[%c0_4, %c0_5] : memref<8x128xf32, #tpu.memory_space<vmem>>, vector<8x128xf32>
    %6 = arith.mulf %3, %4 : vector<8x128xf32>
    %7 = vector.shape_cast %6 : vector<8x128xf32> to vector<1x8x128xf32>
    %cst = arith.constant dense<0.000000e+00> : vector<8x128xf32>
    %8 = vector.multi_reduction <add>, %7, %cst [0] : vector<1x8x128xf32> to vector<8x128xf32>
    %9 = arith.addf %5, %8 : vector<8x128xf32>
    %c0_6 = arith.constant 0 : index
    %c0_7 = arith.constant 0 : index
    %10 = vector.load %arg4[%c0_6, %c0_7] : memref<8x128xf32, #tpu.memory_space<vmem>>, vector<8x128xf32>
    tpu.vector_store %arg4[%c0_6, %c0_7], %9 {strides = array<i32>} : memref<8x128xf32, #tpu.memory_space<vmem>>, vector<8x128xf32>,
    %c0_8 = arith.constant 0 : index
    %c0_9 = arith.constant 0 : index
    %11 = vector.load %arg5[%c0_8, %c0_9] : memref<8x128xf32, #tpu.memory_space<vmem>>, vector<8x128xf32>
    %12 = arith.addf %3, %4 : vector<8x128xf32>
    %13 = vector.shape_cast %12 : vector<8x128xf32> to vector<1x8x128xf32>
    %cst_10 = arith.constant dense<0.000000e+00> : vector<8x128xf32>
    %14 = vector.multi_reduction <add>, %13, %cst_10 [0] : vector<1x8x128xf32> to vector<8x128xf32>
    %15 = arith.addf %11, %14 : vector<8x128xf32>
    %c0_11 = arith.constant 0 : index
    %c0_12 = arith.constant 0 : index
    %16 = vector.load %arg5[%c0_11, %c0_12] : memref<8x128xf32, #tpu.memory_space<vmem>>, vector<8x128xf32>
    tpu.vector_store %arg5[%c0_11, %c0_12], %15 {strides = array<i32>} : memref<8x128xf32, #tpu.memory_space<vmem>>, vector<8x128xf32>,
    return
  }
  func.func @transform_0(%arg0: i32, %arg1: i32) -> (i32, i32) {
    %c1_i32 = arith.constant 1 : i32
    %0 = arith.muli %arg0, %c1_i32 : i32
    %1 = arith.addi %0, %arg1 : i32
    %c0_i32 = arith.constant 0 : i32
    %c0_i32_0 = arith.constant 0 : i32
    return %1, %c0_i32 : i32, i32
  }
  func.func @transform_1(%arg0: i32, %arg1: i32) -> (i32, i32) {
    %c1_i32 = arith.constant 1 : i32
    %0 = arith.muli %arg0, %c1_i32 : i32
    %1 = arith.addi %0, %arg1 : i32
    %c0_i32 = arith.constant 0 : i32
    %c0_i32_0 = arith.constant 0 : i32
    return %1, %c0_i32 : i32, i32
  }
  func.func @transform_2(%arg0: i32, %arg1: i32) -> (i32, i32) {
    %c0_i32 = arith.constant 0 : i32
    %c0_i32_0 = arith.constant 0 : i32
    return %arg0, %c0_i32 : i32, i32
  }
  func.func @transform_3(%arg0: i32, %arg1: i32) -> (i32, i32) {
    %c0_i32 = arith.constant 0 : i32
    %c0_i32_0 = arith.constant 0 : i32
    return %arg0, %c0_i32 : i32, i32
  }
}

</mosaic_0001>

<llo_original>
// kernel: tpu_custom_call.1
$region0: #{tpu_custom_call.1}
  #allocation0 [shape = 'u32[]', space=smem, size = 0x4, offset = 0x4, fixed_abs, tag = 'smem constant byte address 0x4 - core index']
  #allocation1 [shape = 'u32[144,128]{1,0:T(1,128)}', space=vmem, size = 0x12000, scoped, tag = 'internal scratch']
  %s0 = inlined_call_operand.hbm [shape: f32[16,128], index: 0, kind: input, shape index: {}]
  %s1 = inlined_call_operand.hbm [shape: f32[16,128], index: 1, kind: input, shape index: {}]
  %s2 = inlined_call_operand.hbm [shape: f32[16,128], index: 2, kind: output, shape index: {0}]
  %s3 = inlined_call_operand.hbm [shape: f32[16,128], index: 3, kind: output, shape index: {1}]
  %4 = xla_tuple %s2, %s3
  %s5 = sld [smem:[#allocation0]]
  $region61: #{tpu_custom_call.1} parent=0
    _
  %s7 = ssub.s32 1, %s5
  %s8 = scalar_select 0, %s7, %s5
  $region1: #{tpu_custom_call.1} parent=0
    #allocation2 [shape = 'u8[8192]{0}', space=vmem, size = 0x2000, scoped, tag = 'input window, operand 0']
    #allocation3 [shape = 's32[2]{0}', space=sflag, size = 0x8, scoped, tag = 'scoped memory for tpu_custom_call.1']
    #allocation4 [shape = 's32[2]{0}', space=sflag, size = 0x8, scoped, tag = 'scoped memory for tpu_custom_call.1']
    #allocation5 [shape = 'u8[8192]{0}', space=vmem, size = 0x2000, scoped, tag = 'input window, operand 1']
    #allocation6 [shape = 's32[2]{0}', space=sflag, size = 0x8, scoped, tag = 'scoped memory for tpu_custom_call.1']
    #allocation7 [shape = 'u8[8192]{0}', space=vmem, size = 0x2000, scoped, tag = 'output window, operand 0']
    #allocation8 [shape = 'u8[8192]{0}', space=vmem, size = 0x2000, scoped, tag = 'output window, operand 1']
    #allocation9 [shape = 's32[2]{0}', space=sflag, size = 0x8, scoped, tag = 'scoped memory for tpu_custom_call.1']
    %9 = vsyncpa [#allocation3], 0
    %s10 = scalar_lea.sflag [#allocation3], 1
    %11 = vsyncpa %s10, 0
    %12 = vsyncpa [#allocation6], 0
    %s13 = scalar_lea.sflag [#allocation6], 1
    %14 = vsyncpa %s13, 0
    %15 = vsyncpa [#allocation4], 0
    %s16 = scalar_lea.sflag [#allocation4], 1
    %17 = vsyncpa %s16, 0
    %18 = vsyncpa [#allocation9], 0
    %s19 = scalar_lea.sflag [#allocation9], 1
    %20 = vsyncpa %s19, 0
    loop: start=0, step=1, limit=4
    $region2: #{tpu_custom_call.1} parent=1 // loop_pre_header
      _
    $region3: #{tpu_custom_call.1} parent=1 // loop_header
      %s22 = sphi 0, %s26
      %p23 = scmp.ge.s32.totalorder %s22, 4
      %s29 = sphi 0, %s41
      %s30 = sphi 0, %s37
      %s31 = sphi 0, %s29
      %s32 = sphi 0, %s30
      %s33 = sphi 0, %s31
      %s34 = sphi 0, %s32
      %s46 = sphi 0, %s48
      %s49 = sphi 0, %s46
      %s50 = sphi 0, %s49
      %s66 = sphi 0, %s50
      %s74 = sphi 0, %s76
      %s77 = sphi 0, %s74
      %s78 = sphi 0, %s77
      %s94 = sphi 0, %s78
      %s100 = sphi 0, %s102
      %s103 = sphi 0, %s100
      %s104 = sphi 0, %s103
      %s120 = sphi 0, %s104
      %s126 = sphi 0, %s128
      %s129 = sphi 0, %s126
      %s130 = sphi 0, %s129
      %s146 = sphi 0, %s130
    $region4: #{tpu_custom_call.1} parent=1 // loop_header_branch
      %25 = sbr.rel (%p23) target = $region8
    $region5: #{tpu_custom_call.1} parent=1 // loop_body
      %s27 = ssub.s32 %s22, 1
      %s28 = ssub.s32 %s22, 2
      %s35 = sadd.s32 1, %s30
      %p36 = scmp.ge.s32.totalorder %s35, 1
      %s37 = scalar_select %p36, 0, %s35
      %s38 = sadd.s32 1, %s29
      %s39 = scalar_select %p36, %s38, %s29
      %p40 = scmp.ge.s32.totalorder %s39, 2
      %s41 = scalar_select %p40, 0, %s39
      %s42 = sadd.s32 %s29, %s30
      %s43 = sadd.s32 %s41, %s37
      %s44 = ssub.s32 %s42, %s43
      %p45 = scmp.eq.s32.totalorder %s44, 0
      %s47 = sadd.s32 %s46, 1
      %s48 = scalar_select %p45, %s46, %s47
      %p51 = pneg %p45
      %p52 = scmp.eq.s32.totalorder %s22, 1
      %p53 = por %p51, %p52
      %p54 = scmp.ne.s32.totalorder %s46, %s49
      %p55 = scmp.eq.s32.totalorder %s22, 0
      %p56 = por %p54, %p55
      %p57 = scmp.ne.s32.totalorder %s46, %s49
      %p58 = scmp.eq.s32.totalorder %s27, 1
      %p59 = por %p57, %p58
      %p60 = scmp.ne.s32.totalorder %s49, %s50
      %p61 = scmp.eq.s32.totalorder %s27, 0
      %p62 = por %p60, %p61
      %p63 = scmp.ne.s32.totalorder %s49, %s50
      %p64 = scmp.eq.s32.totalorder %s28, 1
      %p65 = por %p63, %p64
      %p67 = scmp.ne.s32.totalorder %s50, %s66
      %p68 = scmp.eq.s32.totalorder %s28, 0
      %p69 = por %p67, %p68
      %s70 = sadd.s32 %s29, %s30
      %s71 = sadd.s32 %s41, %s37
      %s72 = ssub.s32 %s70, %s71
      %p73 = scmp.eq.s32.totalorder %s72, 0
      %s75 = sadd.s32 %s74, 1
      %s76 = scalar_select %p73, %s74, %s75
      %p79 = pneg %p73
      %p80 = scmp.eq.s32.totalorder %s22, 1
      %p81 = por %p79, %p80
      %p82 = scmp.ne.s32.totalorder %s74, %s77
      %p83 = scmp.eq.s32.totalorder %s22, 0
      %p84 = por %p82, %p83
      %p85 = scmp.ne.s32.totalorder %s74, %s77
      %p86 = scmp.eq.s32.totalorder %s27, 1
      %p87 = por %p85, %p86
      %p88 = scmp.ne.s32.totalorder %s77, %s78
      %p89 = scmp.eq.s32.totalorder %s27, 0
      %p90 = por %p88, %p89
      %p91 = scmp.ne.s32.totalorder %s77, %s78
      %p92 = scmp.eq.s32.totalorder %s28, 1
      %p93 = por %p91, %p92
      %p95 = scmp.ne.s32.totalorder %s78, %s94
      %p96 = scmp.eq.s32.totalorder %s28, 0
      %p97 = por %p95, %p96
      %s98 = ssub.s32 %s29, %s41
      %p99 = scmp.eq.s32.totalorder %s98, 0
      %s101 = sadd.s32 %s100, 1
      %s102 = scalar_select %p99, %s100, %s101
      %p105 = pneg %p99
      %p106 = scmp.eq.s32.totalorder %s22, 1
      %p107 = por %p105, %p106
      %p108 = scmp.ne.s32.totalorder %s100, %s103
      %p109 = scmp.eq.s32.totalorder %s22, 0
      %p110 = por %p108, %p109
      %p111 = scmp.ne.s32.totalorder %s100, %s103
      %p112 = scmp.eq.s32.totalorder %s27, 1
      %p113 = por %p111, %p112
      %p114 = scmp.ne.s32.totalorder %s103, %s104
      %p115 = scmp.eq.s32.totalorder %s27, 0
      %p116 = por %p114, %p115
      %p117 = scmp.ne.s32.totalorder %s103, %s104
      %p118 = scmp.eq.s32.totalorder %s28, 1
      %p119 = por %p117, %p118
      %p121 = scmp.ne.s32.totalorder %s104, %s120
      %p122 = scmp.eq.s32.totalorder %s28, 0
      %p123 = por %p121, %p122
      %s124 = ssub.s32 %s29, %s41
      %p125 = scmp.eq.s32.totalorder %s124, 0
      %s127 = sadd.s32 %s126, 1
      %s128 = scalar_select %p125, %s126, %s127
      %p131 = pneg %p125
      %p132 = scmp.eq.s32.totalorder %s22, 1
      %p133 = por %p131, %p132
      %p134 = scmp.ne.s32.totalorder %s126, %s129
      %p135 = scmp.eq.s32.totalorder %s22, 0
      %p136 = por %p134, %p135
      %p137 = scmp.ne.s32.totalorder %s126, %s129
      %p138 = scmp.eq.s32.totalorder %s27, 1
      %p139 = por %p137, %p138
      %p140 = scmp.ne.s32.totalorder %s129, %s130
      %p141 = scmp.eq.s32.totalorder %s27, 0
      %p142 = por %p140, %p141
      %p143 = scmp.ne.s32.totalorder %s129, %s130
      %p144 = scmp.eq.s32.totalorder %s28, 1
      %p145 = por %p143, %p144
      %p147 = scmp.ne.s32.totalorder %s130, %s146
      %p148 = scmp.eq.s32.totalorder %s28, 0
      %p149 = por %p147, %p148
      %p150 = scmp.le.s32.totalorder 1, %s22
      %p151 = scmp.lt.s32.totalorder %s22, 3
      %p152 = pnand %p150, %p151
      %p153 = pneg %p152
      // Predicated region
      $region9: #{tpu_custom_call.1} parent=5 // pred_check
        _
      $region10: #{tpu_custom_call.1} parent=5 // pred_check_branch
        %155 = sbr.rel (%p152) target = $region12
      $region11: #{tpu_custom_call.1} parent=5 // pred_region
        %s156 = ssub.s32 %s22, 1
      $region12: #{tpu_custom_call.1} parent=5 // pred_fallthru
        _
      %p157 = scmp.lt.s32.totalorder %s22, 2
      // Predicated region
      $region13: #{tpu_custom_call.1} parent=5 // pred_check
        %p158 = pneg %p157
      $region14: #{tpu_custom_call.1} parent=5 // pred_check_branch
        %160 = sbr.rel (%p158) target = $region16
      $region15: #{tpu_custom_call.1} parent=5 // pred_region
        // Predicated region
        $region17: #{tpu_custom_call.1} parent=15 // pred_check
          %p161 = pneg %p56
        $region18: #{tpu_custom_call.1} parent=15 // pred_check_branch
          %163 = sbr.rel (%p161) target = $region20
        $region19: #{tpu_custom_call.1} parent=15 // pred_region
          %s164 = sand.u32 %s46, 1
          %s165 = scalar_lea.sflag [#allocation3], %s164
          %s166 = sand.u32 %s46, 1
          %s167 = smul.addr %s166, 8
          %s168 = scalar_lea.vmem [#allocation2], %s167
          %s169 = sadd.s32 %s29, %s30
          %s171 = ssub.s32 128, 128
          %172 = vsyncadd %s165, %s171
          %s173 = smul.addr %s169, 128
          %s174 = scalar_lea.hbm %s0, %s173
          %s176 = sshll.u32 %s168, 4
          %s177 = int_to_ptr.vmem [resolvable:$true] %s176
          %179 = dma.hbm_to_vmem [thread:$0]  %s174, 128, %s177, %s165
        $region20: #{tpu_custom_call.1} parent=15 // pred_fallthru
          _
        // Predicated region
        $region21: #{tpu_custom_call.1} parent=15 // pred_check
          %p180 = pneg %p84
        $region22: #{tpu_custom_call.1} parent=15 // pred_check_branch
          %182 = sbr.rel (%p180) target = $region24
        $region23: #{tpu_custom_call.1} parent=15 // pred_region
          %s183 = sand.u32 %s74, 1
          %s184 = scalar_lea.sflag [#allocation6], %s183
          %s185 = sand.u32 %s74, 1
          %s186 = smul.addr %s185, 8
          %s187 = scalar_lea.vmem [#allocation5], %s186
          %s188 = sadd.s32 %s29, %s30
          %s190 = ssub.s32 128, 128
          %191 = vsyncadd %s184, %s190
          %s192 = smul.addr %s188, 128
          %s193 = scalar_lea.hbm %s1, %s192
          %s195 = sshll.u32 %s187, 4
          %s196 = int_to_ptr.vmem [resolvable:$true] %s195
          %198 = dma.hbm_to_vmem [thread:$0]  %s193, 128, %s196, %s184
        $region24: #{tpu_custom_call.1} parent=15 // pred_fallthru
          _
      $region16: #{tpu_custom_call.1} parent=5 // pred_fallthru
        _
      %p199 = scmp.le.s32.totalorder 1, %s22
      %p200 = scmp.lt.s32.totalorder %s22, 3
      %p201 = pnand %p199, %p200
      %p202 = pneg %p201
      // Predicated region
      $region25: #{tpu_custom_call.1} parent=5 // pred_check
        _
      $region26: #{tpu_custom_call.1} parent=5 // pred_check_branch
        %204 = sbr.rel (%p201) target = $region28
      $region27: #{tpu_custom_call.1} parent=5 // pred_region
        %s205 = ssub.s32 %s22, 1
        %s206 = sand.u32 %s49, 1
        %s207 = scalar_lea.sflag [#allocation3], %s206
        %s208 = sand.u32 %s49, 1
        %s209 = smul.addr %s208, 8
        %s210 = scalar_lea.vmem [#allocation2], %s209
        // Predicated region
        $region29: #{tpu_custom_call.1} parent=27 // pred_check
          %p211 = pneg %p62
        $region30: #{tpu_custom_call.1} parent=27 // pred_check_branch
          %213 = sbr.rel (%p211) target = $region32
        $region31: #{tpu_custom_call.1} parent=27 // pred_region
          %214 = dma.done %s207, 128
        $region32: #{tpu_custom_call.1} parent=27 // pred_fallthru
          _
        %s215 = sand.u32 %s77, 1
        %s216 = scalar_lea.sflag [#allocation6], %s215
        %s217 = sand.u32 %s77, 1
        %s218 = smul.addr %s217, 8
        %s219 = scalar_lea.vmem [#allocation5], %s218
        // Predicated region
        $region33: #{tpu_custom_call.1} parent=27 // pred_check
          %p220 = pneg %p90
        $region34: #{tpu_custom_call.1} parent=27 // pred_check_branch
          %222 = sbr.rel (%p220) target = $region36
        $region35: #{tpu_custom_call.1} parent=27 // pred_region
          %223 = dma.done %s216, 128
        $region36: #{tpu_custom_call.1} parent=27 // pred_fallthru
          _
        %s224 = sand.u32 %s49, 1
        %s225 = scalar_lea.sflag [#allocation3], %s224
        %s226 = sand.u32 %s49, 1
        %s227 = smul.addr %s226, 8
        %s228 = scalar_lea.vmem [#allocation2], %s227
        %p229 = pneg %p62
        %p230 = pneg %p59
        %s231 = sand.u32 %s77, 1
        %s232 = scalar_lea.sflag [#allocation6], %s231
        %s233 = sand.u32 %s77, 1
        %s234 = smul.addr %s233, 8
        %s235 = scalar_lea.vmem [#allocation5], %s234
        %p236 = pneg %p90
        %p237 = pneg %p87
        %p238 = pneg %p116
        %p239 = pneg %p113
        %s240 = sand.u32 %s103, 1
        %s241 = scalar_lea.sflag [#allocation4], %s240
        %s242 = sand.u32 %s103, 1
        %s243 = smul.addr %s242, 8
        %s244 = scalar_lea.vmem [#allocation7], %s243
        %p245 = pneg %p142
        %p246 = pneg %p139
        %s247 = sand.u32 %s129, 1
        %s248 = scalar_lea.sflag [#allocation9], %s247
        %s249 = sand.u32 %s129, 1
        %s250 = smul.addr %s249, 8
        %s251 = scalar_lea.vmem [#allocation8], %s250
        %s252 = sadd.s32 %s31, %s32
        %s253 = sadd.s32 %s31, %s32
        %p254 = scmp.eq.s32.totalorder %s32, 0
        // Predicated region
        $region37: #{tpu_custom_call.1} parent=27 // pred_check
          %p255 = pneg %p254
        $region38: #{tpu_custom_call.1} parent=27 // pred_check_branch
          %257 = sbr.rel (%p255) target = $region40
        $region39: #{tpu_custom_call.1} parent=27 // pred_region
          %258 = vst [vmem:[%s244] sm:$0xff] 0.0
          %259 = vst [vmem:[%s251] sm:$0xff] 0.0
        $region40: #{tpu_custom_call.1} parent=27 // pred_fallthru
          _
        %v260 = vld [vmem:[%s210] sm:$0xff]
        %v261 = vld [vmem:[%s219] sm:$0xff]
        %v262 = vld [vmem:[%s244] sm:$0xff]
        %v263 = vmul.f32 %v260, %v261
        %v264 = vadd.f32 %v263, 0.0
        %v265 = vadd.f32 %v262, %v264
        %266 = vst [vmem:[%s244] sm:$0xff] %v265
        %v267 = vld [vmem:[%s251] sm:$0xff]
        %v268 = vadd.f32 %v260, %v261
        %v269 = vadd.f32 %v268, 0.0
        %v270 = vadd.f32 %v267, %v269
        %271 = vst [vmem:[%s251] sm:$0xff] %v270
        %s272 = sand.u32 %s103, 1
        %s273 = scalar_lea.sflag [#allocation4], %s272
        %s274 = sand.u32 %s103, 1
        %s275 = smul.addr %s274, 8
        %s276 = scalar_lea.vmem [#allocation7], %s275
        %s277 = sand.u32 %s129, 1
        %s278 = scalar_lea.sflag [#allocation9], %s277
        %s279 = sand.u32 %s129, 1
        %s280 = smul.addr %s279, 8
        %s281 = scalar_lea.vmem [#allocation8], %s280
        // Predicated region
        $region41: #{tpu_custom_call.1} parent=27 // pred_check
          %p282 = pneg %p113
        $region42: #{tpu_custom_call.1} parent=27 // pred_check_branch
          %284 = sbr.rel (%p282) target = $region44
        $region43: #{tpu_custom_call.1} parent=27 // pred_region
          %s286 = ssub.s32 128, 128
          %287 = vsyncadd %s273, %s286
          %s288 = smul.addr %s31, 128
          %s289 = scalar_lea.hbm %s2, %s288
          %s291 = sshll.u32 %s276, 4
          %s292 = int_to_ptr.vmem [resolvable:$true] %s291
          %294 = dma.vmem_to_hbm [thread:$0]  %s292, 128, %s289, %s273
        $region44: #{tpu_custom_call.1} parent=27 // pred_fallthru
          _
        // Predicated region
        $region45: #{tpu_custom_call.1} parent=27 // pred_check
          %p295 = pneg %p139
        $region46: #{tpu_custom_call.1} parent=27 // pred_check_branch
          %297 = sbr.rel (%p295) target = $region48
        $region47: #{tpu_custom_call.1} parent=27 // pred_region
          %s299 = ssub.s32 128, 128
          %300 = vsyncadd %s278, %s299
          %s301 = smul.addr %s31, 128
          %s302 = scalar_lea.hbm %s3, %s301
          %s304 = sshll.u32 %s281, 4
          %s305 = int_to_ptr.vmem [resolvable:$true] %s304
          %307 = dma.vmem_to_hbm [thread:$0]  %s305, 128, %s302, %s278
        $region48: #{tpu_custom_call.1} parent=27 // pred_fallthru
          _
      $region28: #{tpu_custom_call.1} parent=5 // pred_fallthru
        _
      %p308 = scmp.le.s32.totalorder 2, %s22
      // Predicated region
      $region49: #{tpu_custom_call.1} parent=5 // pred_check
        %p309 = pneg %p308
      $region50: #{tpu_custom_call.1} parent=5 // pred_check_branch
        %311 = sbr.rel (%p309) target = $region52
      $region51: #{tpu_custom_call.1} parent=5 // pred_region
        %s312 = ssub.s32 %s22, 2
        // Predicated region
        $region53: #{tpu_custom_call.1} parent=51 // pred_check
          %p313 = pneg %p119
        $region54: #{tpu_custom_call.1} parent=51 // pred_check_branch
          %315 = sbr.rel (%p313) target = $region56
        $region55: #{tpu_custom_call.1} parent=51 // pred_region
          %s316 = sand.u32 %s104, 1
          %s317 = scalar_lea.sflag [#allocation4], %s316
          %s318 = sand.u32 %s104, 1
          %s319 = smul.addr %s318, 8
          %s320 = scalar_lea.vmem [#allocation7], %s319
          %321 = dma.done %s317, 128
        $region56: #{tpu_custom_call.1} parent=51 // pred_fallthru
          _
        // Predicated region
        $region57: #{tpu_custom_call.1} parent=51 // pred_check
          %p322 = pneg %p145
        $region58: #{tpu_custom_call.1} parent=51 // pred_check_branch
          %324 = sbr.rel (%p322) target = $region60
        $region59: #{tpu_custom_call.1} parent=51 // pred_region
          %s325 = sand.u32 %s130, 1
          %s326 = scalar_lea.sflag [#allocation9], %s325
          %s327 = sand.u32 %s130, 1
          %s328 = smul.addr %s327, 8
          %s329 = scalar_lea.vmem [#allocation8], %s328
          %330 = dma.done %s326, 128
        $region60: #{tpu_custom_call.1} parent=51 // pred_fallthru
          _
      $region52: #{tpu_custom_call.1} parent=5 // pred_fallthru
        _
    $region6: #{tpu_custom_call.1} parent=1 // loop_footer
      %s26 = sadd.s32 1, %s22
    $region7: #{tpu_custom_call.1} parent=1 // loop_footer_branch
      %21 = sbr.rel target = $region3
    $region8: #{tpu_custom_call.1} parent=1 // loop_exit
      _
    %331 = vsyncpa [#allocation3], 1
    %s332 = scalar_lea.sflag [#allocation3], 1
    %333 = vsyncpa %s332, 1
    %334 = vsyncpa [#allocation6], 1
    %s335 = scalar_lea.sflag [#allocation6], 1
    %336 = vsyncpa %s335, 1
    %337 = vsyncpa [#allocation4], 1
    %s338 = scalar_lea.sflag [#allocation4], 1
    %339 = vsyncpa %s338, 1
    %340 = vsyncpa [#allocation9], 1
    %s341 = scalar_lea.sflag [#allocation9], 1
    %342 = vsyncpa %s341, 1

</llo_original>
